<compile_context>
chip_gen: v7x
topology: tpu7x:2x2x1
jax: 0.10.0
libtpu: 0.0.40
codegen_flags: <defaults>
</compile_context>

<pallas_src>
import functools
import math

import jax
import jax.numpy as jnp
from jax.experimental import pallas as pl
from jax.experimental.pallas import tpu as pltpu


def _round_up(x, m):
    return ((x + m - 1) // m) * m


# ----------------------------------------------------------------------------
# Kernels
# ----------------------------------------------------------------------------
def _permute_mxu_kernel_f32(x_ref, p_ref, o_ref):
    """Exact f32 lane permutation via three bf16 MXU passes.

    x is split into exact bf16 summands b1 + b2 + b3 == x (each residual is
    exactly representable), each is multiplied by the 0/1 permutation matrix P
    (exact in bf16) with f32 accumulation, and the partials are summed
    smallest-first so every f32 add is exact.
    """
    x = x_ref[...]                                   # (R, Wp) f32
    p = p_ref[...]                                   # (Wp, Wp) bf16, 0/1
    b1 = x.astype(jnp.bfloat16)
    r1 = x - b1.astype(jnp.float32)                  # exact
    b2 = r1.astype(jnp.bfloat16)
    b3 = (r1 - b2.astype(jnp.float32)).astype(jnp.bfloat16)   # exact residual
    acc = jnp.dot(b3, p, preferred_element_type=jnp.float32)
    acc = acc + jnp.dot(b2, p, preferred_element_type=jnp.float32)
    acc = acc + jnp.dot(b1, p, preferred_element_type=jnp.float32)
    o_ref[...] = acc


def _permute_mxu_kernel_bf16(x_ref, p_ref, o_ref):
    acc = jnp.dot(x_ref[...], p_ref[...], preferred_element_type=jnp.float32)
    o_ref[...] = acc.astype(o_ref.dtype)


def _permute_concat_kernel(x_ref, o_ref, *, perm):
    """Fallback: permute contiguous lane segments, single full-width store."""
    x = x_ref[...]
    o_ref[...] = jnp.concatenate([x[:, s:s + sz] for s, sz in perm], axis=1)


# ----------------------------------------------------------------------------
# Wrapper
# ----------------------------------------------------------------------------
def _choose_pack(W, M):
    """Largest row-pack so pack*W is a multiple of 128 without any padding."""
    if W % 128 == 0:
        return 1
    pack = 128 // math.gcd(W, 128)
    if pack * W > 512:        # keep the MXU contraction small (memory-bound on v7x)
        return 1
    if M % pack != 0:         # avoid a whole-array pad copy for <= pack-1 rows
        return 1
    return pack


def split_cat_permute(x, split_sizes, order, *, target_block_bytes=1 << 20):
    """Pallas version of: cat([split(x, split_sizes, dim=3)[i] for i in order], dim=3)."""
    N, C, H, W = x.shape
    assert sum(split_sizes) == W, "split sizes must cover the last dim"
    assert len(order) == len(split_sizes)

    # Static (src_start, size) of each piece in destination (output) order.
    starts, s = [], 0
    for sz in split_sizes:
        starts.append(s)
        s += sz
    pieces = [(int(starts[i]), int(split_sizes[i])) for i in order]

    # Flatten leading dims: the permuted axis W maps to TPU lanes.
    M = N * C * H
    itemsize = jnp.dtype(x.dtype).itemsize
    sublane = max(8, 32 // itemsize)          # 8 (f32), 16 (bf16), 32 (int8)

    # Lane-dense packing: pack consecutive rows into one 128-multiple row.
    pack = _choose_pack(W, M)
    Mp, Wp = M // pack, W * pack
    xp = x.reshape(Mp, Wp)                    # free row-major bitcast reshape

    # Destination-lane -> source-lane map over one packed row.
    dst_to_src = []
    for k in range(pack):
        for s0, sz in pieces:
            dst_to_src.extend(range(k * W + s0, k * W + s0 + sz))

    # Row tiling: ~1 MiB blocks, multiple of `sublane`, and >= 8 grid steps for
    # large inputs (so both v7x TensorCores get work); small inputs stay 1 step.
    bytes_per_row = Wp * itemsize
    tr_bytes = max(sublane, (target_block_bytes // bytes_per_row) // sublane * sublane)
    tr_split = _round_up(pl.cdiv(Mp, 8), sublane)
    tile_rows = min(tr_bytes, tr_split)
    tile_rows = max(tile_rows, min(256, _round_up(Mp, sublane)), sublane)

    grid = (pl.cdiv(Mp, tile_rows),)          # ragged last block handled by Pallas
    cparams = pltpu.CompilerParams(dimension_semantics=("parallel",))

    use_mxu = (x.dtype == jnp.float32 or x.dtype == jnp.bfloat16) and Wp <= 512
    if use_mxu:
        # 0/1 permutation matrix P[src, dst] (exact in bf16); stays resident in
        # VMEM (index_map is constant, so it is DMA'd only once).
        src_idx = jnp.arange(Wp, dtype=jnp.int32)[:, None]
        dst_idx = jnp.asarray(dst_to_src, dtype=jnp.int32)[None, :]
        perm_mat = (src_idx == dst_idx).astype(jnp.bfloat16)

        kernel = (_permute_mxu_kernel_f32 if x.dtype == jnp.float32
                  else _permute_mxu_kernel_bf16)
        outp = pl.pallas_call(
            kernel,
            out_shape=jax.ShapeDtypeStruct((Mp, Wp), x.dtype),
            grid=grid,
            in_specs=[pl.BlockSpec((tile_rows, Wp), lambda i: (i, 0)),
                      pl.BlockSpec((Wp, Wp), lambda i: (0, 0))],
            out_specs=pl.BlockSpec((tile_rows, Wp), lambda i: (i, 0)),
            compiler_params=cparams,
        )(xp, perm_mat)
    else:
        perm = tuple((k * W + s0, sz) for k in range(pack) for (s0, sz) in pieces)
        kernel = functools.partial(_permute_concat_kernel, perm=perm)
        outp = pl.pallas_call(
            kernel,
            out_shape=jax.ShapeDtypeStruct((Mp, Wp), x.dtype),
            grid=grid,
            in_specs=[pl.BlockSpec((tile_rows, Wp), lambda i: (i, 0))],
            out_specs=pl.BlockSpec((tile_rows, Wp), lambda i: (i, 0)),
            compiler_params=cparams,
        )(xp)

    return outp.reshape(N, C, H, W)           # free reshape, no slicing


def model_forward(x1):
    """Mirrors Model.forward: performs the split+cat, returns True."""
    N, C, H, W = x1.shape
    # First five sizes as in the PyTorch module, padded to 8 pieces covering W.
    base = [1, C, 1, H, W // 4]
    rem = W - sum(base)
    assert rem >= 3, "input last dim too small for 8 split pieces"
    pad = [rem // 3, rem // 3, rem - 2 * (rem // 3)]
    split_sizes = base + pad                      # 8 pieces, sums to W
    order = [0, 3, 7, 2, 6, 1, 5, 4]              # cat order from the module

    v2 = split_cat_permute(x1, split_sizes, order)
    return True, v2, split_sizes, order


if __name__ == "__main__":
    key = jax.random.PRNGKey(0)
    # Small NCHW input; W chosen so all 8 split pieces are non-empty.
    N, C, H, W = 2, 4, 16, 64
    x1 = jax.random.normal(key, (N, C, H, W), dtype=jnp.float32)

    result, v2, split_sizes, order = model_forward(x1)
    v2 = jax.block_until_ready(v2)

    # Pure-JAX reference for the split+cat permutation.
    starts = [0]
    for sz in split_sizes[:-1]:
        starts.append(starts[-1] + sz)
    pieces_ref = [
        jax.lax.dynamic_slice_in_dim(x1, starts[i], split_sizes[i], axis=3)
        for i in range(len(split_sizes))
    ]
    ref = jnp.concatenate([pieces_ref[i] for i in order], axis=3)

    assert result is True
    assert v2.shape == x1.shape and v2.dtype == x1.dtype
    # Pure permutation -> exact equality, not allclose.
    assert bool(jnp.array_equal(v2, ref)), "Pallas output mismatch vs reference"

    print("KERNEL_OK")
</pallas_src>

<mosaic_0001>
module attributes {stable_mosaic.version = 11 : i64} {
  func.func @_permute_mxu_kernel_f32(%arg0: i32, %arg1: memref<64x128xf32, #tpu.memory_space<vmem>>, %arg2: memref<128x128xbf16, #tpu.memory_space<vmem>>, %arg3: memref<64x128xf32, #tpu.memory_space<vmem>>) attributes {dimension_semantics = [#tpu.dimension_semantics<parallel>], iteration_bounds = array<i64: 1>, scalar_prefetch = 0 : i64, scratch_operands = 0 : i64, tpu.core_type = #tpu.core_type<tc>, window_params = [{transform_indices = @transform_0, window_bounds = array<i64: 64, 128>}, {pipeline_mode = #tpu.pipeline_mode<synchronous>, transform_indices = @transform_1, window_bounds = array<i64: 128, 128>}, {transform_indices = @transform_2, window_bounds = array<i64: 64, 128>}]} {
    %c0 = arith.constant 0 : index
    %c0_0 = arith.constant 0 : index
    %0 = vector.load %arg1[%c0, %c0_0] : memref<64x128xf32, #tpu.memory_space<vmem>>, vector<64x128xf32>
    %c0_1 = arith.constant 0 : index
    %c0_2 = arith.constant 0 : index
    %1 = vector.load %arg2[%c0_1, %c0_2] : memref<128x128xbf16, #tpu.memory_space<vmem>>, vector<128x128xbf16>
    %2 = arith.truncf %0 : vector<64x128xf32> to vector<64x128xbf16>
    %3 = arith.extf %2 : vector<64x128xbf16> to vector<64x128xf32>
    %4 = arith.subf %0, %3 : vector<64x128xf32>
    %5 = arith.truncf %4 : vector<64x128xf32> to vector<64x128xbf16>
    %6 = arith.extf %5 : vector<64x128xbf16> to vector<64x128xf32>
    %7 = arith.subf %4, %6 : vector<64x128xf32>
    %8 = arith.truncf %7 : vector<64x128xf32> to vector<64x128xbf16>
    %cst = arith.constant dense<0.000000e+00> : vector<64x128xf32>
    %9 = tpu.matmul %8, %1, %cst {dimension_numbers = #tpu.dot_dimension_numbers<[1], [0], [0], [1], [0, 0, 1, 1], [], []>} : vector<64x128xbf16>, vector<128x128xbf16>, vector<64x128xf32> -> vector<64x128xf32>
    %cst_3 = arith.constant dense<0.000000e+00> : vector<64x128xf32>
    %10 = tpu.matmul %5, %1, %cst_3 {dimension_numbers = #tpu.dot_dimension_numbers<[1], [0], [0], [1], [0, 0, 1, 1], [], []>} : vector<64x128xbf16>, vector<128x128xbf16>, vector<64x128xf32> -> vector<64x128xf32>
    %11 = arith.addf %9, %10 : vector<64x128xf32>
    %cst_4 = arith.constant dense<0.000000e+00> : vector<64x128xf32>
    %12 = tpu.matmul %2, %1, %cst_4 {dimension_numbers = #tpu.dot_dimension_numbers<[1], [0], [0], [1], [0, 0, 1, 1], [], []>} : vector<64x128xbf16>, vector<128x128xbf16>, vector<64x128xf32> -> vector<64x128xf32>
    %13 = arith.addf %11, %12 : vector<64x128xf32>
    %c0_5 = arith.constant 0 : index
    %c0_6 = arith.constant 0 : index
    %14 = vector.load %arg3[%c0_5, %c0_6] : memref<64x128xf32, #tpu.memory_space<vmem>>, vector<64x128xf32>
    tpu.vector_store %arg3[%c0_5, %c0_6], %13 {strides = array<i32>} : memref<64x128xf32, #tpu.memory_space<vmem>>, vector<64x128xf32>,
    return
  }
  func.func @transform_0(%arg0: i32) -> (i32, i32) {
    %c0_i32 = arith.constant 0 : i32
    %c0_i32_0 = arith.constant 0 : i32
    return %arg0, %c0_i32 : i32, i32
  }
  func.func @transform_1(%arg0: i32) -> (i32, i32) {
    %c0_i32 = arith.constant 0 : i32
    %c0_i32_0 = arith.constant 0 : i32
    %c0_i32_1 = arith.constant 0 : i32
    return %c0_i32, %c0_i32_0 : i32, i32
  }
  func.func @transform_2(%arg0: i32) -> (i32, i32) {
    %c0_i32 = arith.constant 0 : i32
    %c0_i32_0 = arith.constant 0 : i32
    return %arg0, %c0_i32 : i32, i32
  }
}

</mosaic_0001>

<llo_original>
// kernel: tpu_custom_call.1
$region0: #{tpu_custom_call.1}
  #allocation0 [shape = 'u32[]', space=smem, size = 0x4, offset = 0x4, fixed_abs, tag = 'smem constant byte address 0x4 - core index']
  #allocation1 [shape = 'u32[144,128]{1,0:T(1,128)}', space=vmem, size = 0x12000, scoped, tag = 'internal scratch']
  %s0 = inlined_call_operand.hbm [shape: f32[64,128], index: 0, kind: input, shape index: {}]
  %s1 = inlined_call_operand.hbm [shape: bf16[128,128], index: 1, kind: input, shape index: {}]
  %s2 = inlined_call_operand.hbm [shape: f32[64,128], index: 2, kind: output, shape index: {}]
  %s3 = sld [smem:[#allocation0]]
  $region26: #{tpu_custom_call.1} parent=0
    _
  %s5 = ssub.s32 1, %s3
  %s6 = scalar_select 0, %s5, %s3
  $region1: #{tpu_custom_call.1} parent=0
    #allocation2 [shape = 'u8[32768]{0}', space=vmem, size = 0x8000, scoped, tag = 'input window, operand 0, single buffered']
    #allocation3 [shape = 's32[1]{0}', space=sflag, size = 0x4, scoped, tag = 'scoped memory for tpu_custom_call.1']
    #allocation4 [shape = 's32[1]{0}', space=sflag, size = 0x4, scoped, tag = 'scoped memory for tpu_custom_call.1']
    #allocation5 [shape = 'u8[32768]{0}', space=vmem, size = 0x8000, scoped, tag = 'input window, operand 1, single buffered']
    #allocation6 [shape = 's32[1]{0}', space=sflag, size = 0x4, scoped, tag = 'scoped memory for tpu_custom_call.1']
    #allocation7 [shape = 'u8[32768]{0}', space=vmem, size = 0x8000, scoped, tag = 'output window, operand 0, single buffered']
    %7 = vsyncpa [#allocation3], 0
    %8 = vsyncpa [#allocation6], 0
    %9 = vsyncpa [#allocation4], 0
    // Predicated region
    $region2: #{tpu_custom_call.1} parent=1 // pred_check
      _
    $region3: #{tpu_custom_call.1} parent=1 // pred_check_branch
      %11 = sbr.rel (0) target = $region5
    $region4: #{tpu_custom_call.1} parent=1 // pred_region
      %s13 = ssub.s32 1024, 1024
      %14 = vsyncadd [#allocation3], %s13
      %s15 = sshll.u32 [#allocation2], 4
      %s16 = int_to_ptr.vmem [resolvable:$true] %s15
      %21 = dma.hbm_to_vmem [thread:$0]  %s0, 1024, %s16, [#allocation3], 128, 128, 8
    $region5: #{tpu_custom_call.1} parent=1 // pred_fallthru
      _
    // Predicated region
    $region6: #{tpu_custom_call.1} parent=1 // pred_check
      _
    $region7: #{tpu_custom_call.1} parent=1 // pred_check_branch
      %23 = sbr.rel (0) target = $region9
    $region8: #{tpu_custom_call.1} parent=1 // pred_region
      %s25 = ssub.s32 1024, 1024
      %26 = vsyncadd [#allocation6], %s25
      %s27 = sshll.u32 [#allocation5], 4
      %s28 = int_to_ptr.vmem [resolvable:$true] %s27
      %33 = dma.hbm_to_vmem [thread:$0]  %s1, 1024, %s28, [#allocation6], 64, 64, 4
    $region9: #{tpu_custom_call.1} parent=1 // pred_fallthru
      _
    // Predicated region
    $region10: #{tpu_custom_call.1} parent=1 // pred_check
      _
    $region11: #{tpu_custom_call.1} parent=1 // pred_check_branch
      %35 = sbr.rel (0) target = $region13
    $region12: #{tpu_custom_call.1} parent=1 // pred_region
      %36 = dma.done [#allocation3], 1024
    $region13: #{tpu_custom_call.1} parent=1 // pred_fallthru
      _
    // Predicated region
    $region14: #{tpu_custom_call.1} parent=1 // pred_check
      _
    $region15: #{tpu_custom_call.1} parent=1 // pred_check_branch
      %38 = sbr.rel (0) target = $region17
    $region16: #{tpu_custom_call.1} parent=1 // pred_region
      %39 = dma.done [#allocation6], 1024
    $region17: #{tpu_custom_call.1} parent=1 // pred_fallthru
      _
    %v41 = vld [vmem:[#allocation2] sm:$0xff]
    %v42 = vld [vmem:[#allocation2 + $0x8] sm:$0xff]
    %v43 = vld [vmem:[#allocation2 + $0x10] sm:$0xff]
    %v44 = vld [vmem:[#allocation2 + $0x18] sm:$0xff]
    %v45 = vld [vmem:[#allocation2 + $0x20] sm:$0xff]
    %v46 = vld [vmem:[#allocation2 + $0x28] sm:$0xff]
    %v47 = vld [vmem:[#allocation2 + $0x30] sm:$0xff]
    %v48 = vld [vmem:[#allocation2 + $0x38] sm:$0xff]
    %v49 = vld [vmem:[#allocation5] sm:$0xf]
    %v50 = vld [vmem:[#allocation5 + $0x4] sm:$0xf]
    %v51 = vld [vmem:[#allocation5 + $0x8] sm:$0xf]
    %v52 = vld [vmem:[#allocation5 + $0xc] sm:$0xf]
    %v53 = vld [vmem:[#allocation5 + $0x10] sm:$0xf]
    %v54 = vld [vmem:[#allocation5 + $0x14] sm:$0xf]
    %v55 = vld [vmem:[#allocation5 + $0x18] sm:$0xf]
    %v56 = vld [vmem:[#allocation5 + $0x1c] sm:$0xf]
    %v57 = vld [vmem:[#allocation5 + $0x20] sm:$0xf]
    %v58 = vld [vmem:[#allocation5 + $0x24] sm:$0xf]
    %v59 = vld [vmem:[#allocation5 + $0x28] sm:$0xf]
    %v60 = vld [vmem:[#allocation5 + $0x2c] sm:$0xf]
    %v61 = vld [vmem:[#allocation5 + $0x30] sm:$0xf]
    %v62 = vld [vmem:[#allocation5 + $0x34] sm:$0xf]
    %v63 = vld [vmem:[#allocation5 + $0x38] sm:$0xf]
    %v64 = vld [vmem:[#allocation5 + $0x3c] sm:$0xf]
    %v65 = vpack.c.bf16 %v42, %v41
    %v66 = vpack.c.bf16 %v44, %v43
    %v67 = vpack.c.bf16 %v46, %v45
    %v68 = vpack.c.bf16 %v48, %v47
    %v69 = vunpack.c.l.bf16 %v65
    %v70 = vunpack.c.h.bf16 %v65
    %v71 = vunpack.c.l.bf16 %v66
    %v72 = vunpack.c.h.bf16 %v66
    %v73 = vunpack.c.l.bf16 %v67
    %v74 = vunpack.c.h.bf16 %v67
    %v75 = vunpack.c.l.bf16 %v68
    %v76 = vunpack.c.h.bf16 %v68
    %v77 = vsub.f32 %v41, %v69
    %v78 = vsub.f32 %v42, %v70
    %v79 = vsub.f32 %v43, %v71
    %v80 = vsub.f32 %v44, %v72
    %v81 = vsub.f32 %v45, %v73
    %v82 = vsub.f32 %v46, %v74
    %v83 = vsub.f32 %v47, %v75
    %v84 = vsub.f32 %v48, %v76
    %v85 = vpack.c.bf16 %v78, %v77
    %v86 = vpack.c.bf16 %v80, %v79
    %v87 = vpack.c.bf16 %v82, %v81
    %v88 = vpack.c.bf16 %v84, %v83
    %v89 = vunpack.c.l.bf16 %v85
    %v90 = vunpack.c.h.bf16 %v85
    %v91 = vunpack.c.l.bf16 %v86
    %v92 = vunpack.c.h.bf16 %v86
    %v93 = vunpack.c.l.bf16 %v87
    %v94 = vunpack.c.h.bf16 %v87
    %v95 = vunpack.c.l.bf16 %v88
    %v96 = vunpack.c.h.bf16 %v88
    %v97 = vsub.f32 %v77, %v89
    %v98 = vsub.f32 %v78, %v90
    %v99 = vsub.f32 %v79, %v91
    %v100 = vsub.f32 %v80, %v92
    %v101 = vsub.f32 %v81, %v93
    %v102 = vsub.f32 %v82, %v94
    %v103 = vsub.f32 %v83, %v95
    %v104 = vsub.f32 %v84, %v96
    %v105 = vpack.c.bf16 %v98, %v97
    %v106 = vpack.c.bf16 %v100, %v99
    %v107 = vpack.c.bf16 %v102, %v101
    %v108 = vpack.c.bf16 %v104, %v103
    %v125 = vunpack.c.l.b16 %v49
    %v126 = vunpack.c.l.b16 %v50
    %v127 = vunpack.c.l.b16 %v51
    %v128 = vunpack.c.l.b16 %v52
    %v129 = vunpack.c.l.b16 %v53
    %v130 = vunpack.c.l.b16 %v54
    %v131 = vunpack.c.l.b16 %v55
    %v132 = vunpack.c.l.b16 %v56
    %v133 = vunpack.c.l.b16 %v57
    %v134 = vunpack.c.l.b16 %v58
    %v135 = vunpack.c.l.b16 %v59
    %v136 = vunpack.c.l.b16 %v60
    %v137 = vunpack.c.l.b16 %v61
    %v138 = vunpack.c.l.b16 %v62
    %v139 = vunpack.c.l.b16 %v63
    %v140 = vunpack.c.l.b16 %v64
    %v141 = vpack.c.b16 %v126, %v125
    %v142 = vpack.c.b16 %v128, %v127
    %v143 = vpack.c.b16 %v130, %v129
    %v144 = vpack.c.b16 %v132, %v131
    %v145 = vpack.c.b16 %v134, %v133
    %v146 = vpack.c.b16 %v136, %v135
    %v147 = vpack.c.b16 %v138, %v137
    %v148 = vpack.c.b16 %v140, %v139
    %157 = vmatprep.subr.bf16.mxu0 0
    %158 = vmatpush1.bf16.msra.mxu0 %v141
    %159 = vmatprep.subr.bf16.mxu0 0
    %160 = vmatpush1.bf16.msra.mxu0 %v142
    %161 = vmatprep.subr.bf16.mxu0 0
    %162 = vmatpush1.bf16.msra.mxu0 %v143
    %163 = vmatprep.subr.bf16.mxu0 0
    %164 = vmatpush1.bf16.msra.mxu0 %v144
    %165 = vmatprep.subr.bf16.mxu0 0
    %166 = vmatpush1.bf16.msra.mxu0 %v145
    %167 = vmatprep.subr.bf16.mxu0 0
    %168 = vmatpush1.bf16.msra.mxu0 %v146
    %169 = vmatprep.subr.bf16.mxu0 0
    %170 = vmatpush1.bf16.msra.mxu0 %v147
    %171 = vmatprep.subr.bf16.mxu0 0
    %172 = vmatpush1.bf16.msra.mxu0 %v148
    %173 = vmatprep.subr.bf16.mxu0 0
    %174 = vmatpush1.bf16.msra.mxu0 0
    %175 = vmatprep.subr.bf16.mxu0 0
    %176 = vmatpush1.bf16.msra.mxu0 0
    %177 = vmatprep.subr.bf16.mxu0 0
    %178 = vmatpush1.bf16.msra.mxu0 0
    %179 = vmatprep.subr.bf16.mxu0 0
    %180 = vmatpush1.bf16.msra.mxu0 0
    %181 = vmatprep.subr.bf16.mxu0 0
    %182 = vmatpush1.bf16.msra.mxu0 0
    %183 = vmatprep.subr.bf16.mxu0 0
    %184 = vmatpush1.bf16.msra.mxu0 0
    %185 = vmatprep.subr.bf16.mxu0 0
    %186 = vmatpush1.bf16.msra.mxu0 0
    %187 = vmatprep.subr.bf16.mxu0 0
    %188 = vmatpush1.bf16.msra.mxu0 0
    %189 = vmatprep.mubr.bf16.mxu0 0
    %190 = vmatmul.mubr.bf16.gmra.mrb[0].mxu0 %v85
    %v191 = vpop.f32.mrb[0].mxu0
    %v192 = vadd.f32 0.0, %v191
    %v193 = vpop.f32.mrb[0].mxu0
    %v194 = vpop.f32.mrb[0].mxu0
    %v195 = vadd.f32 0.0, %v194
    %v196 = vpop.f32.mrb[0].mxu0
    %197 = vmatprep.mubr.bf16.mxu0 0
    %198 = vmatmul.mubr.bf16.gmra.mrb[0].mxu0 %v86
    %v199 = vpop.f32.mrb[0].mxu0
    %v200 = vadd.f32 0.0, %v199
    %v201 = vpop.f32.mrb[0].mxu0
    %v202 = vpop.f32.mrb[0].mxu0
    %v203 = vadd.f32 0.0, %v202
    %v204 = vpop.f32.mrb[0].mxu0
    %205 = vmatprep.mubr.bf16.mxu0 0
    %206 = vmatmul.mubr.bf16.gmra.mrb[0].mxu0 %v87
    %v207 = vpop.f32.mrb[0].mxu0
    %v208 = vadd.f32 0.0, %v207
    %v209 = vpop.f32.mrb[0].mxu0
    %v210 = vpop.f32.mrb[0].mxu0
    %v211 = vadd.f32 0.0, %v210
    %v212 = vpop.f32.mrb[0].mxu0
    %213 = vmatprep.mubr.bf16.mxu0 0
    %214 = vmatmul.mubr.bf16.gmra.mrb[0].mxu0 %v88
    %v215 = vpop.f32.mrb[0].mxu0
    %v216 = vadd.f32 0.0, %v215
    %v217 = vpop.f32.mrb[0].mxu0
    %v218 = vpop.f32.mrb[0].mxu0
    %v219 = vadd.f32 0.0, %v218
    %v220 = vpop.f32.mrb[0].mxu0
    %221 = vdwg.mxu0
    %222 = vmatprep.subr.bf16.mxu0 0
    %223 = vmatpush1.bf16.msra.mxu0 %v141
    %224 = vmatprep.subr.bf16.mxu0 0
    %225 = vmatpush1.bf16.msra.mxu0 %v142
    %226 = vmatprep.subr.bf16.mxu0 0
    %227 = vmatpush1.bf16.msra.mxu0 %v143
    %228 = vmatprep.subr.bf16.mxu0 0
    %229 = vmatpush1.bf16.msra.mxu0 %v144
    %230 = vmatprep.subr.bf16.mxu0 0
    %231 = vmatpush1.bf16.msra.mxu0 %v145
    %232 = vmatprep.subr.bf16.mxu0 0
    %233 = vmatpush1.bf16.msra.mxu0 %v146
    %234 = vmatprep.subr.bf16.mxu0 0
    %235 = vmatpush1.bf16.msra.mxu0 %v147
    %236 = vmatprep.subr.bf16.mxu0 0
    %237 = vmatpush1.bf16.msra.mxu0 %v148
    %238 = vmatprep.subr.bf16.mxu0 0
    %239 = vmatpush1.bf16.msra.mxu0 0
    %240 = vmatprep.subr.bf16.mxu0 0
    %241 = vmatpush1.bf16.msra.mxu0 0
    %242 = vmatprep.subr.bf16.mxu0 0
    %243 = vmatpush1.bf16.msra.mxu0 0
    %244 = vmatprep.subr.bf16.mxu0 0
    %245 = vmatpush1.bf16.msra.mxu0 0
    %246 = vmatprep.subr.bf16.mxu0 0
    %247 = vmatpush1.bf16.msra.mxu0 0
    %248 = vmatprep.subr.bf16.mxu0 0
    %249 = vmatpush1.bf16.msra.mxu0 0
    %250 = vmatprep.subr.bf16.mxu0 0
    %251 = vmatpush1.bf16.msra.mxu0 0
    %252 = vmatprep.subr.bf16.mxu0 0
    %253 = vmatpush1.bf16.msra.mxu0 0
    %254 = vmatprep.mubr.bf16.mxu0 0
    %255 = vmatmul.mubr.bf16.gmra.mrb[0].mxu0 %v105
    %v256 = vpop.f32.mrb[0].mxu0
    %v257 = vadd.f32 %v192, %v256
    %v258 = vpop.f32.mrb[0].mxu0
    %v259 = vpop.f32.mrb[0].mxu0
    %v260 = vadd.f32 %v195, %v259
    %v261 = vpop.f32.mrb[0].mxu0
    %262 = vmatprep.mubr.bf16.mxu0 0
    %263 = vmatmul.mubr.bf16.gmra.mrb[0].mxu0 %v106
    %v264 = vpop.f32.mrb[0].mxu0
    %v265 = vadd.f32 %v200, %v264
    %v266 = vpop.f32.mrb[0].mxu0
    %v267 = vpop.f32.mrb[0].mxu0
    %v268 = vadd.f32 %v203, %v267
    %v269 = vpop.f32.mrb[0].mxu0
    %270 = vmatprep.mubr.bf16.mxu0 0
    %271 = vmatmul.mubr.bf16.gmra.mrb[0].mxu0 %v107
    %v272 = vpop.f32.mrb[0].mxu0
    %v273 = vadd.f32 %v208, %v272
    %v274 = vpop.f32.mrb[0].mxu0
    %v275 = vpop.f32.mrb[0].mxu0
    %v276 = vadd.f32 %v211, %v275
    %v277 = vpop.f32.mrb[0].mxu0
    %278 = vmatprep.mubr.bf16.mxu0 0
    %279 = vmatmul.mubr.bf16.gmra.mrb[0].mxu0 %v108
    %v280 = vpop.f32.mrb[0].mxu0
    %v281 = vadd.f32 %v216, %v280
    %v282 = vpop.f32.mrb[0].mxu0
    %v283 = vpop.f32.mrb[0].mxu0
    %v284 = vadd.f32 %v219, %v283
    %v285 = vpop.f32.mrb[0].mxu0
    %286 = vdwg.mxu0
    %287 = vmatprep.subr.bf16.mxu0 0
    %288 = vmatpush1.bf16.msra.mxu0 %v141
    %289 = vmatprep.subr.bf16.mxu0 0
    %290 = vmatpush1.bf16.msra.mxu0 %v142
    %291 = vmatprep.subr.bf16.mxu0 0
    %292 = vmatpush1.bf16.msra.mxu0 %v143
    %293 = vmatprep.subr.bf16.mxu0 0
    %294 = vmatpush1.bf16.msra.mxu0 %v144
    %295 = vmatprep.subr.bf16.mxu0 0
    %296 = vmatpush1.bf16.msra.mxu0 %v145
    %297 = vmatprep.subr.bf16.mxu0 0
    %298 = vmatpush1.bf16.msra.mxu0 %v146
    %299 = vmatprep.subr.bf16.mxu0 0
    %300 = vmatpush1.bf16.msra.mxu0 %v147
    %301 = vmatprep.subr.bf16.mxu0 0
    %302 = vmatpush1.bf16.msra.mxu0 %v148
    %303 = vmatprep.subr.bf16.mxu0 0
    %304 = vmatpush1.bf16.msra.mxu0 0
    %305 = vmatprep.subr.bf16.mxu0 0
    %306 = vmatpush1.bf16.msra.mxu0 0
    %307 = vmatprep.subr.bf16.mxu0 0
    %308 = vmatpush1.bf16.msra.mxu0 0
    %309 = vmatprep.subr.bf16.mxu0 0
    %310 = vmatpush1.bf16.msra.mxu0 0
    %311 = vmatprep.subr.bf16.mxu0 0
    %312 = vmatpush1.bf16.msra.mxu0 0
    %313 = vmatprep.subr.bf16.mxu0 0
    %314 = vmatpush1.bf16.msra.mxu0 0
    %315 = vmatprep.subr.bf16.mxu0 0
    %316 = vmatpush1.bf16.msra.mxu0 0
    %317 = vmatprep.subr.bf16.mxu0 0
    %318 = vmatpush1.bf16.msra.mxu0 0
    %319 = vmatprep.mubr.bf16.mxu0 0
    %320 = vmatmul.mubr.bf16.gmra.mrb[0].mxu0 %v65
    %v321 = vpop.f32.mrb[0].mxu0
    %v322 = vadd.f32 0.0, %v321
    %v323 = vpop.f32.mrb[0].mxu0
    %v324 = vpop.f32.mrb[0].mxu0
    %v325 = vadd.f32 0.0, %v324
    %v326 = vpop.f32.mrb[0].mxu0
    %327 = vmatprep.mubr.bf16.mxu0 0
    %328 = vmatmul.mubr.bf16.gmra.mrb[0].mxu0 %v66
    %v329 = vpop.f32.mrb[0].mxu0
    %v330 = vadd.f32 0.0, %v329
    %v331 = vpop.f32.mrb[0].mxu0
    %v332 = vpop.f32.mrb[0].mxu0
    %v333 = vadd.f32 0.0, %v332
    %v334 = vpop.f32.mrb[0].mxu0
    %335 = vmatprep.mubr.bf16.mxu0 0
    %336 = vmatmul.mubr.bf16.gmra.mrb[0].mxu0 %v67
    %v337 = vpop.f32.mrb[0].mxu0
    %v338 = vadd.f32 0.0, %v337
    %v339 = vpop.f32.mrb[0].mxu0
    %v340 = vpop.f32.mrb[0].mxu0
    %v341 = vadd.f32 0.0, %v340
    %v342 = vpop.f32.mrb[0].mxu0
    %343 = vmatprep.mubr.bf16.mxu0 0
    %344 = vmatmul.mubr.bf16.gmra.mrb[0].mxu0 %v68
    %v345 = vpop.f32.mrb[0].mxu0
    %v346 = vadd.f32 0.0, %v345
    %v347 = vpop.f32.mrb[0].mxu0
    %v348 = vpop.f32.mrb[0].mxu0
    %v349 = vadd.f32 0.0, %v348
    %v350 = vpop.f32.mrb[0].mxu0
    %351 = vdwg.mxu0
    %v352 = vadd.f32 %v257, %v322
    %v353 = vadd.f32 %v260, %v325
    %v354 = vadd.f32 %v265, %v330
    %v355 = vadd.f32 %v268, %v333
    %v356 = vadd.f32 %v273, %v338
    %v357 = vadd.f32 %v276, %v341
    %v358 = vadd.f32 %v281, %v346
    %v359 = vadd.f32 %v284, %v349
    %360 = vst [vmem:[#allocation7] sm:$0xff] %v352
    %361 = vst [vmem:[#allocation7 + $0x8] sm:$0xff] %v353
    %362 = vst [vmem:[#allocation7 + $0x10] sm:$0xff] %v354
    %363 = vst [vmem:[#allocation7 + $0x18] sm:$0xff] %v355
    %364 = vst [vmem:[#allocation7 + $0x20] sm:$0xff] %v356
    %365 = vst [vmem:[#allocation7 + $0x28] sm:$0xff] %v357
    %366 = vst [vmem:[#allocation7 + $0x30] sm:$0xff] %v358
    %367 = vst [vmem:[#allocation7 + $0x38] sm:$0xff] %v359
    // Predicated region
    $region18: #{tpu_custom_call.1} parent=1 // pred_check
      _
    $region19: #{tpu_custom_call.1} parent=1 // pred_check_branch
      %369 = sbr.rel (0) target = $region21
    $region20: #{tpu_custom_call.1} parent=1 // pred_region
      %s371 = ssub.s32 1024, 1024
      %372 = vsyncadd [#allocation4], %s371
      %s373 = sshll.u32 [#allocation7], 4
      %s374 = int_to_ptr.vmem [resolvable:$true] %s373
      %379 = dma.vmem_to_hbm [thread:$0]  %s374, 1024, %s2, [#allocation4], 128, 128, 8
    $region21: #{tpu_custom_call.1} parent=1 // pred_fallthru
      _
    // Predicated region
    $region22: #{tpu_custom_call.1} parent=1 // pred_check
      _
    $region23: #{tpu_custom_call.1} parent=1 // pred_check_branch
      %381 = sbr.rel (0) target = $region25
    $region24: #{tpu_custom_call.1} parent=1 // pred_region
      %382 = dma.done [#allocation4], 1024
    $region25: #{tpu_custom_call.1} parent=1 // pred_fallthru
      _
    %383 = vsyncpa [#allocation3], 1
    %384 = vsyncpa [#allocation6], 1
    %385 = vsyncpa [#allocation4], 1

</llo_original>
